<compile_context>
chip_gen: v7x
topology: tpu7x:2x2x1
jax: 0.10.0
libtpu: 0.0.40
codegen_flags: <defaults>
</compile_context>

<pallas_src>
import jax
import jax.numpy as jnp
from jax.experimental import pallas as pl
from jax.experimental.pallas import tpu as pltpu


def _round_up(n: int, m: int) -> int:
    return ((n + m - 1) // m) * m


def _vmem_footprint(tm: int, Dp: int, th: int) -> int:
    """Approximate VMEM bytes for the pipeline buffers (2x-buffered) + scratch."""
    return (2 * tm * Dp * 4        # x blocks (f32)
            + 2 * tm * Dp * 4      # out blocks (f32)
            + 2 * Dp * th * 2      # w1 blocks (bf16)
            + 2 * th * Dp * 2      # w2 blocks (bf16)
            + 2 * 8 * th * 4       # b1 blocks (f32, sublane-padded)
            + 2 * 8 * Dp * 4       # b2 blocks (f32, sublane-padded)
            + tm * Dp * 2)         # x bf16 scratch


def _auto_th(Hp: int, tm: int, Dp: int, budget: int) -> int:
    """Largest multiple of 128 dividing Hp whose footprint fits the VMEM budget."""
    n = Hp // 128
    for d in range(n, 0, -1):
        if n % d == 0 and _vmem_footprint(tm, Dp, d * 128) <= budget:
            return d * 128
    return 128


def _largest_divisor_tile(Hp: int, cap: int) -> int:
    """Largest multiple of 128 that divides Hp and is <= cap."""
    n = Hp // 128
    cap_b = max(1, min(n, cap // 128))
    for d in range(cap_b, 0, -1):
        if n % d == 0:
            return d * 128
    return 128


def _maybe_pad2(a, rows: int, cols: int, dtype):
    a = a.astype(dtype)
    if a.shape != (rows, cols):
        a = jnp.pad(a, ((0, rows - a.shape[0]), (0, cols - a.shape[1])))
    return a


def _residual_ff_kernel(x_ref, w1_ref, b1_ref, w2_ref, b2_ref, o_ref, xbf_ref):
    """One (tm, Dp) token tile x one th-wide hidden-dim slice.

    x_ref:   (tm, Dp) f32    resident across the k (hidden) axis
    w1_ref:  (Dp, th) bf16   constant over the token axis (DMA'd once when th == Hp)
    b1_ref:  (1, th)  f32
    w2_ref:  (th, Dp) bf16
    b2_ref:  (1, Dp)  f32
    o_ref:   (tm, Dp) f32    resident across k; used directly as the accumulator
    xbf_ref: (tm, Dp) bf16   scratch: x cast to bf16 once per token tile
    """
    k = pl.program_id(1)

    @pl.when(k == 0)
    def _init():
        xv = x_ref[...]
        xbf_ref[...] = xv.astype(jnp.bfloat16)
        # Residual + second-layer bias seeded once; matmul partials accumulate on top.
        o_ref[...] = xv + b2_ref[...]

    # First matmul on the MXU (bf16 operands, f32 accumulation).
    h = jnp.dot(xbf_ref[...], w1_ref[...], preferred_element_type=jnp.float32)
    h = h + b1_ref[...]
    # tanh-approximate GELU -> transcendentals go to the EUP slot.
    # TODO(synk): on v5e consider the x*sigmoid(1.702x) form if the single f32 EUP binds.
    h = jax.nn.gelu(h, approximate=True)

    # Partial second matmul for this hidden slice, accumulated in-place in o_ref (f32).
    o_ref[...] += jnp.dot(h.astype(jnp.bfloat16), w2_ref[...],
                          preferred_element_type=jnp.float32)


def residual_add_ff(x, w1, b1, w2, b2, *, tm=None, th=None,
                    vmem_budget_bytes=32 * 1024 * 1024):
    """out = (GELU(x @ w1 + b1) @ w2 + b2) + x, fused in one Pallas kernel.

    x: (B, S, D); w1: (D, H); b1: (1, H); w2: (H, D); b2: (1, D).
    tm: token tile (multiple of 8). Default: target 512, but at least 2 token tiles.
    th: hidden tile (multiple of 128 dividing padded H). Default: H (weights resident)
        if it fits the VMEM budget, else the largest dividing tile that fits.
    """
    B, S, D = x.shape
    H = w1.shape[1]
    M = B * S

    Dp = _round_up(D, 128)
    Hp = _round_up(H, 128)

    # Token tile: >= 2 tiles when possible (feeds both v7x TensorCores); target 512.
    if tm is None:
        tm = min(512, _round_up(max((M + 1) // 2, 8), 8))
    else:
        tm = max(8, _round_up(tm, 8))
    tm = min(tm, _round_up(M, 8))
    Mp = _round_up(M, tm)

    # Hidden tile: collapse the reduction axis (weights VMEM-resident, DMA'd once)
    # whenever the footprint fits; otherwise largest dividing tile under the budget.
    if th is None:
        th = _auto_th(Hp, tm, Dp, vmem_budget_bytes)
    else:
        th = _largest_divisor_tile(Hp, max(128, th))

    # x: pad only when needed (aligned production shapes skip the extra HBM pass).
    x2 = x.reshape(M, D)
    if x2.dtype != jnp.float32:
        x2 = x2.astype(jnp.float32)
    if (Mp, Dp) != (M, D):
        x2 = jnp.pad(x2, ((0, Mp - M), (0, Dp - D)))

    # Weights/biases: pad lane dims to 128 multiples (zero columns/rows are exact).
    w1p = _maybe_pad2(w1, Dp, Hp, jnp.bfloat16)
    b1p = _maybe_pad2(b1, 1, Hp, jnp.float32)
    w2p = _maybe_pad2(w2, Hp, Dp, jnp.bfloat16)
    b2p = _maybe_pad2(b2, 1, Dp, jnp.float32)

    grid = (Mp // tm, Hp // th)  # token tiles (parallel) x hidden slices (reduction, last)
    vmem_limit = int(min(_vmem_footprint(tm, Dp, th) + (16 << 20), 112 << 20))

    out2 = pl.pallas_call(
        _residual_ff_kernel,
        out_shape=jax.ShapeDtypeStruct((Mp, Dp), jnp.float32),
        grid_spec=pltpu.PrefetchScalarGridSpec(
            num_scalar_prefetch=0,
            grid=grid,
            in_specs=[
                pl.BlockSpec((tm, Dp), lambda i, k: (i, 0)),   # x tile (resident over k)
                pl.BlockSpec((Dp, th), lambda i, k: (0, k)),   # w1 (constant over i)
                pl.BlockSpec((1, th), lambda i, k: (0, k)),    # b1
                pl.BlockSpec((th, Dp), lambda i, k: (k, 0)),   # w2 (constant over i)
                pl.BlockSpec((1, Dp), lambda i, k: (0, 0)),    # b2 (constant)
            ],
            out_specs=pl.BlockSpec((tm, Dp), lambda i, k: (i, 0)),
            scratch_shapes=[pltpu.VMEM((tm, Dp), jnp.bfloat16)],
        ),
        compiler_params=pltpu.CompilerParams(
            dimension_semantics=("parallel", "arbitrary"),
            vmem_limit_bytes=vmem_limit,
        ),
        # Output reuses the (padded) x buffer: same shape/dtype, and each x block is
        # read into VMEM before the same-index output block is written back.
        input_output_aliases={0: 0},
    )(x2, w1p, b1p, w2p, b2p)

    if (Mp, Dp) != (M, D):
        out2 = out2[:M, :D]
    return out2.reshape(B, S, D).astype(x.dtype)


def _reference(x, w1, b1, w2, b2):
    """Plain-JAX reference for ResidualAdd(fn)(x) with matching bf16 MXU casts."""
    xb = x.astype(jnp.bfloat16)
    h = jnp.einsum("bsd,dh->bsh", xb, w1.astype(jnp.bfloat16),
                   preferred_element_type=jnp.float32) + b1[0]
    h = jax.nn.gelu(h, approximate=True)
    y = jnp.einsum("bsh,hd->bsd", h.astype(jnp.bfloat16), w2.astype(jnp.bfloat16),
                   preferred_element_type=jnp.float32) + b2[0]
    return y + x


if __name__ == "__main__":
    key = jax.random.PRNGKey(0)
    B, S, D = 2, 8, 64
    H = 4 * D

    k_x, k_w1, k_b1, k_w2, k_b2 = jax.random.split(key, 5)
    x = jax.random.normal(k_x, (B, S, D), dtype=jnp.float32)
    w1 = jax.random.normal(k_w1, (D, H), dtype=jnp.float32) * (1.0 / jnp.sqrt(D))
    b1 = jax.random.normal(k_b1, (1, H), dtype=jnp.float32) * 0.01
    w2 = jax.random.normal(k_w2, (H, D), dtype=jnp.float32) * (1.0 / jnp.sqrt(H))
    b2 = jax.random.normal(k_b2, (1, D), dtype=jnp.float32) * 0.01

    ref = _reference(x, w1, b1, w2, b2)

    # 1) Defaults: weights resident (single k step), 2 token tiles.
    out = jax.block_until_ready(residual_add_ff(x, w1, b1, w2, b2))
    assert out.shape == x.shape and out.dtype == x.dtype
    assert jnp.allclose(out, ref, atol=1e-2, rtol=1e-2), "mismatch (default tiles)"

    # 2) Forced small tiles: exercises the hidden-dim reduction axis
    #    (init at k == 0 + in-place accumulation into o_ref across k).
    out_small = jax.block_until_ready(
        residual_add_ff(x, w1, b1, w2, b2, tm=8, th=128))
    assert jnp.allclose(out_small, ref, atol=1e-2, rtol=1e-2), "mismatch (small tiles)"

    print("KERNEL_OK")
</pallas_src>

<mosaic_0001>
module attributes {stable_mosaic.version = 11 : i64} {
  func.func @_residual_ff_kernel(%arg0: i32, %arg1: i32, %arg2: memref<8x128xf32, #tpu.memory_space<vmem>>, %arg3: memref<128x256xbf16, #tpu.memory_space<vmem>>, %arg4: memref<1x256xf32, #tpu.memory_space<vmem>>, %arg5: memref<256x128xbf16, #tpu.memory_space<vmem>>, %arg6: memref<1x128xf32, #tpu.memory_space<vmem>>, %arg7: memref<8x128xf32, #tpu.memory_space<vmem>>, %arg8: memref<8x128xbf16, #tpu.memory_space<vmem>>) attributes {dimension_semantics = [#tpu.dimension_semantics<parallel>, #tpu.dimension_semantics<arbitrary>], iteration_bounds = array<i64: 2, 1>, scalar_prefetch = 0 : i64, scratch_operands = 1 : i64, tpu.core_type = #tpu.core_type<tc>, window_params = [{transform_indices = @transform_0, window_bounds = array<i64: 8, 128>}, {transform_indices = @transform_1, window_bounds = array<i64: 128, 256>}, {transform_indices = @transform_2, window_bounds = array<i64: 1, 256>}, {transform_indices = @transform_3, window_bounds = array<i64: 256, 128>}, {pipeline_mode = #tpu.pipeline_mode<synchronous>, transform_indices = @transform_4, window_bounds = array<i64: 1, 128>}, {transform_indices = @transform_5, window_bounds = array<i64: 8, 128>}]} {
    %c0_i32 = arith.constant 0 : i32
    %0 = arith.cmpi eq, %arg1, %c0_i32 : i32
    %1 = arith.extui %0 : i1 to i32
    %c0_i32_0 = arith.constant 0 : i32
    %2 = arith.cmpi ne, %1, %c0_i32_0 : i32
    scf.if %2 {
      %c0_17 = arith.constant 0 : index
      %c0_18 = arith.constant 0 : index
      %28 = vector.load %arg2[%c0_17, %c0_18] : memref<8x128xf32, #tpu.memory_space<vmem>>, vector<8x128xf32>
      %29 = arith.truncf %28 : vector<8x128xf32> to vector<8x128xbf16>
      %c0_19 = arith.constant 0 : index
      %c0_20 = arith.constant 0 : index
      %30 = vector.load %arg8[%c0_19, %c0_20] : memref<8x128xbf16, #tpu.memory_space<vmem>>, vector<8x128xbf16>
      tpu.vector_store %arg8[%c0_19, %c0_20], %29 {strides = array<i32>} : memref<8x128xbf16, #tpu.memory_space<vmem>>, vector<8x128xbf16>,
      %c0_21 = arith.constant 0 : index
      %c0_22 = arith.constant 0 : index
      %31 = vector.load %arg6[%c0_21, %c0_22] : memref<1x128xf32, #tpu.memory_space<vmem>>, vector<1x128xf32>
      %32 = vector.broadcast %31 : vector<1x128xf32> to vector<8x128xf32>
      %33 = arith.addf %28, %32 : vector<8x128xf32>
      %c0_23 = arith.constant 0 : index
      %c0_24 = arith.constant 0 : index
      %34 = vector.load %arg7[%c0_23, %c0_24] : memref<8x128xf32, #tpu.memory_space<vmem>>, vector<8x128xf32>
      tpu.vector_store %arg7[%c0_23, %c0_24], %33 {strides = array<i32>} : memref<8x128xf32, #tpu.memory_space<vmem>>, vector<8x128xf32>,
    } else {
    }
    %c0 = arith.constant 0 : index
    %c0_1 = arith.constant 0 : index
    %3 = vector.load %arg8[%c0, %c0_1] : memref<8x128xbf16, #tpu.memory_space<vmem>>, vector<8x128xbf16>
    %c0_2 = arith.constant 0 : index
    %c0_3 = arith.constant 0 : index
    %4 = vector.load %arg3[%c0_2, %c0_3] : memref<128x256xbf16, #tpu.memory_space<vmem>>, vector<128x256xbf16>
    %cst = arith.constant dense<0.000000e+00> : vector<8x256xf32>
    %5 = tpu.matmul %3, %4, %cst {dimension_numbers = #tpu.dot_dimension_numbers<[1], [0], [0], [1], [0, 0, 1, 1], [], []>} : vector<8x128xbf16>, vector<128x256xbf16>, vector<8x256xf32> -> vector<8x256xf32>
    %c0_4 = arith.constant 0 : index
    %c0_5 = arith.constant 0 : index
    %6 = vector.load %arg4[%c0_4, %c0_5] : memref<1x256xf32, #tpu.memory_space<vmem>>, vector<1x256xf32>
    %7 = vector.broadcast %6 : vector<1x256xf32> to vector<8x256xf32>
    %8 = arith.addf %5, %7 : vector<8x256xf32>
    %9 = arith.mulf %8, %8 : vector<8x256xf32>
    %10 = arith.mulf %8, %9 : vector<8x256xf32>
    %cst_6 = arith.constant 4.471500e-02 : f32
    %11 = vector.broadcast %cst_6 : f32 to vector<8x256xf32>
    %12 = arith.mulf %11, %10 : vector<8x256xf32>
    %13 = arith.addf %8, %12 : vector<8x256xf32>
    %cst_7 = arith.constant 0.797884583 : f32
    %14 = vector.broadcast %cst_7 : f32 to vector<8x256xf32>
    %15 = arith.mulf %14, %13 : vector<8x256xf32>
    %16 = math.tanh %15 : vector<8x256xf32>
    %cst_8 = arith.constant 1.000000e+00 : f32
    %17 = vector.broadcast %cst_8 : f32 to vector<8x256xf32>
    %18 = arith.addf %17, %16 : vector<8x256xf32>
    %cst_9 = arith.constant 5.000000e-01 : f32
    %19 = vector.broadcast %cst_9 : f32 to vector<8x256xf32>
    %20 = arith.mulf %19, %18 : vector<8x256xf32>
    %21 = arith.mulf %8, %20 : vector<8x256xf32>
    %c0_10 = arith.constant 0 : index
    %c0_11 = arith.constant 0 : index
    %22 = vector.load %arg7[%c0_10, %c0_11] : memref<8x128xf32, #tpu.memory_space<vmem>>, vector<8x128xf32>
    %23 = arith.truncf %21 : vector<8x256xf32> to vector<8x256xbf16>
    %c0_12 = arith.constant 0 : index
    %c0_13 = arith.constant 0 : index
    %24 = vector.load %arg5[%c0_12, %c0_13] : memref<256x128xbf16, #tpu.memory_space<vmem>>, vector<256x128xbf16>
    %cst_14 = arith.constant dense<0.000000e+00> : vector<8x128xf32>
    %25 = tpu.matmul %23, %24, %cst_14 {dimension_numbers = #tpu.dot_dimension_numbers<[1], [0], [0], [1], [0, 0, 1, 1], [], []>} : vector<8x256xbf16>, vector<256x128xbf16>, vector<8x128xf32> -> vector<8x128xf32>
    %26 = arith.addf %22, %25 : vector<8x128xf32>
    %c0_15 = arith.constant 0 : index
    %c0_16 = arith.constant 0 : index
    %27 = vector.load %arg7[%c0_15, %c0_16] : memref<8x128xf32, #tpu.memory_space<vmem>>, vector<8x128xf32>
    tpu.vector_store %arg7[%c0_15, %c0_16], %26 {strides = array<i32>} : memref<8x128xf32, #tpu.memory_space<vmem>>, vector<8x128xf32>,
    return
  }
  func.func @transform_0(%arg0: i32, %arg1: i32) -> (i32, i32) {
    %c0_i32 = arith.constant 0 : i32
    %c0_i32_0 = arith.constant 0 : i32
    return %arg0, %c0_i32 : i32, i32
  }
  func.func @transform_1(%arg0: i32, %arg1: i32) -> (i32, i32) {
    %c0_i32 = arith.constant 0 : i32
    %c0_i32_0 = arith.constant 0 : i32
    return %c0_i32, %arg1 : i32, i32
  }
  func.func @transform_2(%arg0: i32, %arg1: i32) -> (i32, i32) {
    %c0_i32 = arith.constant 0 : i32
    %c0_i32_0 = arith.constant 0 : i32
    return %c0_i32, %arg1 : i32, i32
  }
  func.func @transform_3(%arg0: i32, %arg1: i32) -> (i32, i32) {
    %c0_i32 = arith.constant 0 : i32
    %c0_i32_0 = arith.constant 0 : i32
    return %arg1, %c0_i32 : i32, i32
  }
  func.func @transform_4(%arg0: i32, %arg1: i32) -> (i32, i32) {
    %c0_i32 = arith.constant 0 : i32
    %c0_i32_0 = arith.constant 0 : i32
    %c0_i32_1 = arith.constant 0 : i32
    return %c0_i32, %c0_i32_0 : i32, i32
  }
  func.func @transform_5(%arg0: i32, %arg1: i32) -> (i32, i32) {
    %c0_i32 = arith.constant 0 : i32
    %c0_i32_0 = arith.constant 0 : i32
    return %arg0, %c0_i32 : i32, i32
  }
}

</mosaic_0001>

<llo_original>
// kernel: tpu_custom_call.1
$region0: #{tpu_custom_call.1}
  #allocation0 [shape = 'u32[]', space=smem, size = 0x4, offset = 0x4, fixed_abs, tag = 'smem constant byte address 0x4 - core index']
  #allocation1 [shape = 'u32[144,128]{1,0:T(1,128)}', space=vmem, size = 0x12000, scoped, tag = 'internal scratch']
  #allocation2 [shape = 'bf16[8,128]{1,0:T(8,128)(2,1)}', space=vmem, size = 0x800, scoped, tag = 'scratch operand']
  %s0 = inlined_call_operand.hbm [shape: f32[16,128], index: 0, kind: input, shape index: {}, may-alias: {0,5}]
  %s1 = inlined_call_operand.hbm [shape: bf16[128,256], index: 1, kind: input, shape index: {}]
  %s2 = inlined_call_operand.vmem [shape: f32[1,256], index: 2, kind: input, shape index: {}]
  %s3 = inlined_call_operand.hbm [shape: bf16[256,128], index: 3, kind: input, shape index: {}]
  %s4 = inlined_call_operand.vmem [shape: f32[1,128], index: 4, kind: input, shape index: {}]
  %s5 = inlined_call_operand.hbm [shape: f32[16,128], index: 5, kind: output, shape index: {}, may-alias: {0,5}]
  %s6 = sld [smem:[#allocation0]]
  $region69: #{tpu_custom_call.1} parent=0
    _
  %s8 = ssub.s32 1, %s6
  %s9 = scalar_select 0, %s8, %s6
  $region1: #{tpu_custom_call.1} parent=0
    #allocation3 [shape = 'u8[8192]{0}', space=vmem, size = 0x2000, scoped, tag = 'input window, operand 0']
    #allocation4 [shape = 's32[2]{0}', space=sflag, size = 0x8, scoped, tag = 'scoped memory for tpu_custom_call.1']
    #allocation5 [shape = 's32[2]{0}', space=sflag, size = 0x8, scoped, tag = 'scoped memory for tpu_custom_call.1']
    #allocation6 [shape = 'u8[65536]{0}', space=vmem, size = 0x10000, scoped, tag = 'input window, operand 1, single buffered']
    #allocation7 [shape = 's32[1]{0}', space=sflag, size = 0x4, scoped, tag = 'scoped memory for tpu_custom_call.1']
    #allocation8 [shape = 'u8[65536]{0}', space=vmem, size = 0x10000, scoped, tag = 'input window, operand 3, single buffered']
    #allocation9 [shape = 'u8[8192]{0}', space=vmem, size = 0x2000, scoped, tag = 'output window, operand 0']
    %10 = vsyncpa [#allocation4], 0
    %s11 = scalar_lea.sflag [#allocation4], 1
    %12 = vsyncpa %s11, 0
    %13 = vsyncpa [#allocation7], 0
    %14 = vsyncpa [#allocation5], 0
    %s15 = scalar_lea.sflag [#allocation5], 1
    %16 = vsyncpa %s15, 0
    loop: start=0, step=1, limit=4
    $region2: #{tpu_custom_call.1} parent=1 // loop_pre_header
      _
    $region3: #{tpu_custom_call.1} parent=1 // loop_header
      %s18 = sphi 0, %s22
      %p19 = scmp.ge.s32.totalorder %s18, 4
      %s25 = sphi 0, %s37
      %s26 = sphi 0, %s33
      %s27 = sphi 0, %s25
      %s28 = sphi 0, %s26
      %s29 = sphi 0, %s27
      %s30 = sphi 0, %s28
      %s40 = sphi 0, %s42
      %s43 = sphi 0, %s40
      %s44 = sphi 0, %s43
      %s60 = sphi 0, %s44
      %s66 = sphi 0, %s68
      %s69 = sphi 0, %s66
      %s70 = sphi 0, %s69
      %s86 = sphi 0, %s70
      %s92 = sphi 0, %s94
      %s95 = sphi 0, %s92
      %s96 = sphi 0, %s95
      %s112 = sphi 0, %s96
      %s118 = sphi 0, %s120
      %s121 = sphi 0, %s118
      %s122 = sphi 0, %s121
      %s138 = sphi 0, %s122
      %s142 = sphi 0, %s142
      %s144 = sphi 0, %s142
      %s145 = sphi 0, %s144
      %s159 = sphi 0, %s145
      %s165 = sphi 0, %s167
      %s168 = sphi 0, %s165
      %s169 = sphi 0, %s168
      %s185 = sphi 0, %s169
    $region4: #{tpu_custom_call.1} parent=1 // loop_header_branch
      %21 = sbr.rel (%p19) target = $region8
    $region5: #{tpu_custom_call.1} parent=1 // loop_body
      %s23 = ssub.s32 %s18, 1
      %s24 = ssub.s32 %s18, 2
      %s31 = sadd.s32 1, %s26
      %p32 = scmp.ge.s32.totalorder %s31, 1
      %s33 = scalar_select %p32, 0, %s31
      %s34 = sadd.s32 1, %s25
      %s35 = scalar_select %p32, %s34, %s25
      %p36 = scmp.ge.s32.totalorder %s35, 2
      %s37 = scalar_select %p36, 0, %s35
      %s38 = ssub.s32 %s25, %s37
      %p39 = scmp.eq.s32.totalorder %s38, 0
      %s41 = sadd.s32 %s40, 1
      %s42 = scalar_select %p39, %s40, %s41
      %p45 = pneg %p39
      %p46 = scmp.eq.s32.totalorder %s18, 1
      %p47 = por %p45, %p46
      %p48 = scmp.ne.s32.totalorder %s40, %s43
      %p49 = scmp.eq.s32.totalorder %s18, 0
      %p50 = por %p48, %p49
      %p51 = scmp.ne.s32.totalorder %s40, %s43
      %p52 = scmp.eq.s32.totalorder %s23, 1
      %p53 = por %p51, %p52
      %p54 = scmp.ne.s32.totalorder %s43, %s44
      %p55 = scmp.eq.s32.totalorder %s23, 0
      %p56 = por %p54, %p55
      %p57 = scmp.ne.s32.totalorder %s43, %s44
      %p58 = scmp.eq.s32.totalorder %s24, 1
      %p59 = por %p57, %p58
      %p61 = scmp.ne.s32.totalorder %s44, %s60
      %p62 = scmp.eq.s32.totalorder %s24, 0
      %p63 = por %p61, %p62
      %s64 = ssub.s32 %s26, %s33
      %p65 = scmp.eq.s32.totalorder %s64, 0
      %s67 = sadd.s32 %s66, 1
      %s68 = scalar_select %p65, %s66, %s67
      %p71 = pneg %p65
      %p72 = scmp.eq.s32.totalorder %s18, 1
      %p73 = por %p71, %p72
      %p74 = scmp.ne.s32.totalorder %s66, %s69
      %p75 = scmp.eq.s32.totalorder %s18, 0
      %p76 = por %p74, %p75
      %p77 = scmp.ne.s32.totalorder %s66, %s69
      %p78 = scmp.eq.s32.totalorder %s23, 1
      %p79 = por %p77, %p78
      %p80 = scmp.ne.s32.totalorder %s69, %s70
      %p81 = scmp.eq.s32.totalorder %s23, 0
      %p82 = por %p80, %p81
      %p83 = scmp.ne.s32.totalorder %s69, %s70
      %p84 = scmp.eq.s32.totalorder %s24, 1
      %p85 = por %p83, %p84
      %p87 = scmp.ne.s32.totalorder %s70, %s86
      %p88 = scmp.eq.s32.totalorder %s24, 0
      %p89 = por %p87, %p88
      %s90 = ssub.s32 %s26, %s33
      %p91 = scmp.eq.s32.totalorder %s90, 0
      %s93 = sadd.s32 %s92, 1
      %s94 = scalar_select %p91, %s92, %s93
      %p97 = pneg %p91
      %p98 = scmp.eq.s32.totalorder %s18, 1
      %p99 = por %p97, %p98
      %p100 = scmp.ne.s32.totalorder %s92, %s95
      %p101 = scmp.eq.s32.totalorder %s18, 0
      %p102 = por %p100, %p101
      %p103 = scmp.ne.s32.totalorder %s92, %s95
      %p104 = scmp.eq.s32.totalorder %s23, 1
      %p105 = por %p103, %p104
      %p106 = scmp.ne.s32.totalorder %s95, %s96
      %p107 = scmp.eq.s32.totalorder %s23, 0
      %p108 = por %p106, %p107
      %p109 = scmp.ne.s32.totalorder %s95, %s96
      %p110 = scmp.eq.s32.totalorder %s24, 1
      %p111 = por %p109, %p110
      %p113 = scmp.ne.s32.totalorder %s96, %s112
      %p114 = scmp.eq.s32.totalorder %s24, 0
      %p115 = por %p113, %p114
      %s116 = ssub.s32 %s26, %s33
      %p117 = scmp.eq.s32.totalorder %s116, 0
      %s119 = sadd.s32 %s118, 1
      %s120 = scalar_select %p117, %s118, %s119
      %p123 = pneg %p117
      %p124 = scmp.eq.s32.totalorder %s18, 1
      %p125 = por %p123, %p124
      %p126 = scmp.ne.s32.totalorder %s118, %s121
      %p127 = scmp.eq.s32.totalorder %s18, 0
      %p128 = por %p126, %p127
      %p129 = scmp.ne.s32.totalorder %s118, %s121
      %p130 = scmp.eq.s32.totalorder %s23, 1
      %p131 = por %p129, %p130
      %p132 = scmp.ne.s32.totalorder %s121, %s122
      %p133 = scmp.eq.s32.totalorder %s23, 0
      %p134 = por %p132, %p133
      %p135 = scmp.ne.s32.totalorder %s121, %s122
      %p136 = scmp.eq.s32.totalorder %s24, 1
      %p137 = por %p135, %p136
      %p139 = scmp.ne.s32.totalorder %s122, %s138
      %p140 = scmp.eq.s32.totalorder %s24, 0
      %p141 = por %p139, %p140
      %s143 = sadd.s32 %s142, 1
      %p146 = scmp.eq.s32.totalorder %s18, 1
      %p147 = scmp.ne.s32.totalorder %s142, %s144
      %p148 = scmp.eq.s32.totalorder %s18, 0
      %p149 = por %p147, %p148
      %p150 = scmp.ne.s32.totalorder %s142, %s144
      %p151 = scmp.eq.s32.totalorder %s23, 1
      %p152 = por %p150, %p151
      %p153 = scmp.ne.s32.totalorder %s144, %s145
      %p154 = scmp.eq.s32.totalorder %s23, 0
      %p155 = por %p153, %p154
      %p156 = scmp.ne.s32.totalorder %s144, %s145
      %p157 = scmp.eq.s32.totalorder %s24, 1
      %p158 = por %p156, %p157
      %p160 = scmp.ne.s32.totalorder %s145, %s159
      %p161 = scmp.eq.s32.totalorder %s24, 0
      %p162 = por %p160, %p161
      %s163 = ssub.s32 %s25, %s37
      %p164 = scmp.eq.s32.totalorder %s163, 0
      %s166 = sadd.s32 %s165, 1
      %s167 = scalar_select %p164, %s165, %s166
      %p170 = pneg %p164
      %p171 = scmp.eq.s32.totalorder %s18, 1
      %p172 = por %p170, %p171
      %p173 = scmp.ne.s32.totalorder %s165, %s168
      %p174 = scmp.eq.s32.totalorder %s18, 0
      %p175 = por %p173, %p174
      %p176 = scmp.ne.s32.totalorder %s165, %s168
      %p177 = scmp.eq.s32.totalorder %s23, 1
      %p178 = por %p176, %p177
      %p179 = scmp.ne.s32.totalorder %s168, %s169
      %p180 = scmp.eq.s32.totalorder %s23, 0
      %p181 = por %p179, %p180
      %p182 = scmp.ne.s32.totalorder %s168, %s169
      %p183 = scmp.eq.s32.totalorder %s24, 1
      %p184 = por %p182, %p183
      %p186 = scmp.ne.s32.totalorder %s169, %s185
      %p187 = scmp.eq.s32.totalorder %s24, 0
      %p188 = por %p186, %p187
      %p189 = scmp.le.s32.totalorder 1, %s18
      %p190 = scmp.lt.s32.totalorder %s18, 3
      %p191 = pnand %p189, %p190
      %p192 = pneg %p191
      // Predicated region
      $region9: #{tpu_custom_call.1} parent=5 // pred_check
        _
      $region10: #{tpu_custom_call.1} parent=5 // pred_check_branch
        %194 = sbr.rel (%p191) target = $region12
      $region11: #{tpu_custom_call.1} parent=5 // pred_region
        %s195 = ssub.s32 %s18, 1
        // Predicated region
        $region13: #{tpu_custom_call.1} parent=11 // pred_check
          %p196 = pneg %p82
        $region14: #{tpu_custom_call.1} parent=11 // pred_check_branch
          %198 = sbr.rel (%p196) target = $region16
        $region15: #{tpu_custom_call.1} parent=11 // pred_region
          %s199 = smul.u32 2, %s28
          %s201 = ssub.s32 2048, 2048
          %202 = vsyncadd [#allocation7], %s201
          %s203 = smul.addr %s199, 64
          %s204 = scalar_lea.hbm %s1, %s203
          %s205 = sshll.u32 [#allocation6], 4
          %s206 = int_to_ptr.vmem [resolvable:$true] %s205
          %211 = dma.hbm_to_vmem [thread:$0]  %s204, 2048, %s206, [#allocation7], 128, 128, 8
        $region16: #{tpu_custom_call.1} parent=11 // pred_fallthru
          _
        // Predicated region
        $region17: #{tpu_custom_call.1} parent=11 // pred_check
          %p212 = pneg %p108
        $region18: #{tpu_custom_call.1} parent=11 // pred_check_branch
          %214 = sbr.rel (%p212) target = $region20
        $region19: #{tpu_custom_call.1} parent=11 // pred_region
          %s215 = smul.u32 2, %s28
          %p216 = scmp.lt.s32.totalorder %s215, 1
          %s217 = scalar_select %p216, %s215, 1
          %s218 = scalar_lea.vmem %s2, %s217
          %s219 = smul.u32 2, %s28
        $region20: #{tpu_custom_call.1} parent=11 // pred_fallthru
          _
        // Predicated region
        $region21: #{tpu_custom_call.1} parent=11 // pred_check
          %p220 = pneg %p134
        $region22: #{tpu_custom_call.1} parent=11 // pred_check_branch
          %222 = sbr.rel (%p220) target = $region24
        $region23: #{tpu_custom_call.1} parent=11 // pred_region
          %s223 = smul.u32 32, %s28
          %s225 = ssub.s32 2048, 2048
          %226 = vsyncadd [#allocation7], %s225
          %s227 = smul.addr %s223, 64
          %s228 = scalar_lea.hbm %s3, %s227
          %s229 = sshll.u32 [#allocation8], 4
          %s230 = int_to_ptr.vmem [resolvable:$true] %s229
          %235 = dma.hbm_to_vmem [thread:$0]  %s228, 2048, %s230, [#allocation7], 64, 64, 4
        $region24: #{tpu_custom_call.1} parent=11 // pred_fallthru
          _
        // Predicated region
        $region25: #{tpu_custom_call.1} parent=11 // pred_check
          %p236 = pneg %p155
        $region26: #{tpu_custom_call.1} parent=11 // pred_check_branch
          %238 = sbr.rel (%p236) target = $region28
        $region27: #{tpu_custom_call.1} parent=11 // pred_region
          _
        $region28: #{tpu_custom_call.1} parent=11 // pred_fallthru
          _
      $region12: #{tpu_custom_call.1} parent=5 // pred_fallthru
        _
      %p239 = scmp.lt.s32.totalorder %s18, 2
      // Predicated region
      $region29: #{tpu_custom_call.1} parent=5 // pred_check
        %p240 = pneg %p239
      $region30: #{tpu_custom_call.1} parent=5 // pred_check_branch
        %242 = sbr.rel (%p240) target = $region32
      $region31: #{tpu_custom_call.1} parent=5 // pred_region
        // Predicated region
        $region33: #{tpu_custom_call.1} parent=31 // pred_check
          %p243 = pneg %p50
        $region34: #{tpu_custom_call.1} parent=31 // pred_check_branch
          %245 = sbr.rel (%p243) target = $region36
        $region35: #{tpu_custom_call.1} parent=31 // pred_region
          %s246 = sand.u32 %s40, 1
          %s247 = scalar_lea.sflag [#allocation4], %s246
          %s248 = sand.u32 %s40, 1
          %s249 = smul.addr %s248, 8
          %s250 = scalar_lea.vmem [#allocation3], %s249
          %s252 = ssub.s32 128, 128
          %253 = vsyncadd %s247, %s252
          %s254 = smul.addr %s25, 128
          %s255 = scalar_lea.hbm %s0, %s254
          %s257 = sshll.u32 %s250, 4
          %s258 = int_to_ptr.vmem [resolvable:$true] %s257
          %260 = dma.hbm_to_vmem [thread:$0]  %s255, 128, %s258, %s247
        $region36: #{tpu_custom_call.1} parent=31 // pred_fallthru
          _
      $region32: #{tpu_custom_call.1} parent=5 // pred_fallthru
        _
      %p261 = scmp.le.s32.totalorder 1, %s18
      %p262 = scmp.lt.s32.totalorder %s18, 3
      %p263 = pnand %p261, %p262
      %p264 = pneg %p263
      // Predicated region
      $region37: #{tpu_custom_call.1} parent=5 // pred_check
        _
      $region38: #{tpu_custom_call.1} parent=5 // pred_check_branch
        %266 = sbr.rel (%p263) target = $region40
      $region39: #{tpu_custom_call.1} parent=5 // pred_region
        %s267 = ssub.s32 %s18, 1
        %s268 = sand.u32 %s43, 1
        %s269 = scalar_lea.sflag [#allocation4], %s268
        %s270 = sand.u32 %s43, 1
        %s271 = smul.addr %s270, 8
        %s272 = scalar_lea.vmem [#allocation3], %s271
        // Predicated region
        $region41: #{tpu_custom_call.1} parent=39 // pred_check
          %p273 = pneg %p56
        $region42: #{tpu_custom_call.1} parent=39 // pred_check_branch
          %275 = sbr.rel (%p273) target = $region44
        $region43: #{tpu_custom_call.1} parent=39 // pred_region
          %276 = dma.done %s269, 128
        $region44: #{tpu_custom_call.1} parent=39 // pred_fallthru
          _
        // Predicated region
        $region45: #{tpu_custom_call.1} parent=39 // pred_check
          %p277 = pneg %p82
        $region46: #{tpu_custom_call.1} parent=39 // pred_check_branch
          %279 = sbr.rel (%p277) target = $region48
        $region47: #{tpu_custom_call.1} parent=39 // pred_region
          %280 = dma.done [#allocation7], 2048
        $region48: #{tpu_custom_call.1} parent=39 // pred_fallthru
          _
        // Predicated region
        $region49: #{tpu_custom_call.1} parent=39 // pred_check
          %p281 = pneg %p134
        $region50: #{tpu_custom_call.1} parent=39 // pred_check_branch
          %283 = sbr.rel (%p281) target = $region52
        $region51: #{tpu_custom_call.1} parent=39 // pred_region
          %284 = dma.done [#allocation7], 2048
        $region52: #{tpu_custom_call.1} parent=39 // pred_fallthru
          _
        %s285 = sand.u32 %s43, 1
        %s286 = scalar_lea.sflag [#allocation4], %s285
        %s287 = sand.u32 %s43, 1
        %s288 = smul.addr %s287, 8
        %s289 = scalar_lea.vmem [#allocation3], %s288
        %p290 = pneg %p56
        %p291 = pneg %p53
        %p292 = pneg %p82
        %p293 = pneg %p79
        %s294 = smul.u32 2, %s28
        %p295 = scmp.lt.s32.totalorder %s294, 1
        %s296 = scalar_select %p295, %s294, 1
        %s297 = scalar_lea.vmem %s2, %s296
        %p298 = pneg %p108
        %p299 = pneg %p105
        %p300 = pneg %p134
        %p301 = pneg %p131
        %p302 = pneg %p155
        %p303 = pneg %p152
        %p304 = pneg %p181
        %p305 = pneg %p178
        %s306 = sand.u32 %s168, 1
        %s307 = scalar_lea.sflag [#allocation5], %s306
        %s308 = sand.u32 %s168, 1
        %s309 = smul.addr %s308, 8
        %s310 = scalar_lea.vmem [#allocation9], %s309
        %s311 = smul.u32 2, %s28
        %s312 = smul.u32 2, %s28
        %p313 = scmp.lt.s32.totalorder %s312, 1
        %s314 = scalar_select %p313, %s312, 1
        %s315 = scalar_lea.vmem %s2, %s314
        %s316 = smul.u32 2, %s28
        %s317 = smul.u32 32, %s28
        %p319 = scmp.eq.s32.totalorder %s28, 0
        // Predicated region
        $region53: #{tpu_custom_call.1} parent=39 // pred_check
          %p320 = pneg %p319
        $region54: #{tpu_custom_call.1} parent=39 // pred_check_branch
          %322 = sbr.rel (%p320) target = $region56
        $region55: #{tpu_custom_call.1} parent=39 // pred_region
          %v323 = vld [vmem:[%s272] sm:$0xff]
          %v324 = vpack.c.bf16 %v323, %v323
          %325 = vst [vmem:[#allocation2] sm:$0xf] %v324
          %v326 = vld [vmem:[%s4] sm:$0x1]
          %v328 = vlaneseq
          %v329 = vshrl.u32 %v328, 7
          %v330 = vsub.s32 0, %v329
          %v331 = vrot.slane %v326, %v330
          %v333 = vadd.f32 %v323, %v331
          %334 = vst [vmem:[%s310] sm:$0xff] %v333
        $region56: #{tpu_custom_call.1} parent=39 // pred_fallthru
          _
        %v335 = vld [vmem:[#allocation2] sm:$0xf]
        %v336 = vld [vmem:[#allocation6] sm:$0xff]
        %v337 = vld [vmem:[#allocation6 + $0x8] sm:$0xff]
        %v338 = vld [vmem:[#allocation6 + $0x10] sm:$0xff]
        %v339 = vld [vmem:[#allocation6 + $0x18] sm:$0xff]
        %v340 = vld [vmem:[#allocation6 + $0x20] sm:$0xff]
        %v341 = vld [vmem:[#allocation6 + $0x28] sm:$0xff]
        %v342 = vld [vmem:[#allocation6 + $0x30] sm:$0xff]
        %v343 = vld [vmem:[#allocation6 + $0x38] sm:$0xff]
        %v344 = vld [vmem:[#allocation6 + $0x40] sm:$0xff]
        %v345 = vld [vmem:[#allocation6 + $0x48] sm:$0xff]
        %v346 = vld [vmem:[#allocation6 + $0x50] sm:$0xff]
        %v347 = vld [vmem:[#allocation6 + $0x58] sm:$0xff]
        %v348 = vld [vmem:[#allocation6 + $0x60] sm:$0xff]
        %v349 = vld [vmem:[#allocation6 + $0x68] sm:$0xff]
        %v350 = vld [vmem:[#allocation6 + $0x70] sm:$0xff]
        %v351 = vld [vmem:[#allocation6 + $0x78] sm:$0xff]
        %v352 = vld [vmem:[%s315] sm:$0x3]
        %v354 = vlaneseq
        %v355 = vshrl.u32 %v354, 7
        %v356 = vsub.s32 0, %v355
        %v357 = vrot.slane %v352, %v356
        %v358 = vlaneseq
        %v359 = vshrl.u32 %v358, 7
        %v360 = vsub.s32 1, %v359
        %v361 = vrot.slane %v352, %v360
        %v380 = vunpack.c.l.b16 %v336
        %v381 = vunpack.c.h.b16 %v336
        %v382 = vunpack.c.l.b16 %v337
        %v383 = vunpack.c.h.b16 %v337
        %v384 = vunpack.c.l.b16 %v338
        %v385 = vunpack.c.h.b16 %v338
        %v386 = vunpack.c.l.b16 %v339
        %v387 = vunpack.c.h.b16 %v339
        %v388 = vunpack.c.l.b16 %v340
        %v389 = vunpack.c.h.b16 %v340
        %v390 = vunpack.c.l.b16 %v341
        %v391 = vunpack.c.h.b16 %v341
        %v392 = vunpack.c.l.b16 %v342
        %v393 = vunpack.c.h.b16 %v342
        %v394 = vunpack.c.l.b16 %v343
        %v395 = vunpack.c.h.b16 %v343
        %v396 = vunpack.c.l.b16 %v344
        %v397 = vunpack.c.h.b16 %v344
        %v398 = vunpack.c.l.b16 %v345
        %v399 = vunpack.c.h.b16 %v345
        %v400 = vunpack.c.l.b16 %v346
        %v401 = vunpack.c.h.b16 %v346
        %v402 = vunpack.c.l.b16 %v347
        %v403 = vunpack.c.h.b16 %v347
        %v404 = vunpack.c.l.b16 %v348
        %v405 = vunpack.c.h.b16 %v348
        %v406 = vunpack.c.l.b16 %v349
        %v407 = vunpack.c.h.b16 %v349
        %v408 = vunpack.c.l.b16 %v350
        %v409 = vunpack.c.h.b16 %v350
        %v410 = vunpack.c.l.b16 %v351
        %v411 = vunpack.c.h.b16 %v351
        %v412 = vpack.c.b16 %v382, %v380
        %v413 = vpack.c.b16 %v383, %v381
        %v414 = vpack.c.b16 %v386, %v384
        %v415 = vpack.c.b16 %v387, %v385
        %v416 = vpack.c.b16 %v390, %v388
        %v417 = vpack.c.b16 %v391, %v389
        %v418 = vpack.c.b16 %v394, %v392
        %v419 = vpack.c.b16 %v395, %v393
        %v420 = vpack.c.b16 %v398, %v396
        %v421 = vpack.c.b16 %v399, %v397
        %v422 = vpack.c.b16 %v402, %v400
        %v423 = vpack.c.b16 %v403, %v401
        %v424 = vpack.c.b16 %v406, %v404
        %v425 = vpack.c.b16 %v407, %v405
        %v426 = vpack.c.b16 %v410, %v408
        %v427 = vpack.c.b16 %v411, %v409
        %444 = vmatprep.subr.bf16.mxu0 %v413
        %445 = vmatpush1.bf16.msra.mxu0 %v412
        %446 = vmatprep.subr.bf16.mxu0 %v415
        %447 = vmatpush1.bf16.msra.mxu0 %v414
        %448 = vmatprep.subr.bf16.mxu0 %v417
        %449 = vmatpush1.bf16.msra.mxu0 %v416
        %450 = vmatprep.subr.bf16.mxu0 %v419
        %451 = vmatpush1.bf16.msra.mxu0 %v418
        %452 = vmatprep.subr.bf16.mxu0 %v421
        %453 = vmatpush1.bf16.msra.mxu0 %v420
        %454 = vmatprep.subr.bf16.mxu0 %v423
        %455 = vmatpush1.bf16.msra.mxu0 %v422
        %456 = vmatprep.subr.bf16.mxu0 %v425
        %457 = vmatpush1.bf16.msra.mxu0 %v424
        %458 = vmatprep.subr.bf16.mxu0 %v427
        %459 = vmatpush1.bf16.msra.mxu0 %v426
        %460 = vmatprep.subr.bf16.mxu0 0
        %461 = vmatpush1.bf16.msra.mxu0 0
        %462 = vmatprep.subr.bf16.mxu0 0
        %463 = vmatpush1.bf16.msra.mxu0 0
        %464 = vmatprep.subr.bf16.mxu0 0
        %465 = vmatpush1.bf16.msra.mxu0 0
        %466 = vmatprep.subr.bf16.mxu0 0
        %467 = vmatpush1.bf16.msra.mxu0 0
        %468 = vmatprep.subr.bf16.mxu0 0
        %469 = vmatpush1.bf16.msra.mxu0 0
        %470 = vmatprep.subr.bf16.mxu0 0
        %471 = vmatpush1.bf16.msra.mxu0 0
        %472 = vmatprep.subr.bf16.mxu0 0
        %473 = vmatpush1.bf16.msra.mxu0 0
        %474 = vmatprep.subr.bf16.mxu0 0
        %475 = vmatpush1.bf16.msra.mxu0 0
        %476 = vmatprep.mubr.bf16.mxu0 0
        %477 = vmatmul.mubr.bf16.gmra.mrb[0].mxu0 %v335
        %v478 = vpop.f32.mrb[0].mxu0
        %v479 = vadd.f32 %v357, %v478
        %v480 = vpop.f32.mrb[0].mxu0
        %v481 = vadd.f32 %v361, %v480
        %v482 = vpop.f32.mrb[0].mxu0
        %v483 = vpop.f32.mrb[0].mxu0
        %484 = vdwg.mxu0
        %v485 = vmul.f32 %v479, %v479
        %v486 = vmul.f32 %v481, %v481
        %v487 = vmul.f32 %v479, %v485
        %v488 = vmul.f32 %v481, %v486
        %v489 = vmul.f32 %v487, 0.044715
        %v490 = vmul.f32 %v488, 0.044715
        %v491 = vadd.f32 %v479, %v489
        %v492 = vadd.f32 %v481, %v490
        %v493 = vmul.f32 %v491, 0.7978846
        %v494 = vmul.f32 %v492, 0.7978846
        %v495 = vtanh.pop %v493
        %v496 = vtanh.pop %v494
        %v497 = vadd.f32 %v495, 1.0
        %v498 = vadd.f32 %v496, 1.0
        %v499 = vmul.f32 %v497, 0.5
        %v500 = vmul.f32 %v498, 0.5
        %v501 = vmul.f32 %v479, %v499
        %v502 = vmul.f32 %v481, %v500
        %v503 = vld [vmem:[%s310] sm:$0xff]
        %v504 = vpack.c.bf16 %v501, %v501
        %v505 = vpack.c.bf16 %v502, %v502
        %v506 = vld [vmem:[#allocation8] sm:$0xf]
        %v507 = vld [vmem:[#allocation8 + $0x4] sm:$0xf]
        %v508 = vld [vmem:[#allocation8 + $0x8] sm:$0xf]
        %v509 = vld [vmem:[#allocation8 + $0xc] sm:$0xf]
        %v510 = vld [vmem:[#allocation8 + $0x10] sm:$0xf]
        %v511 = vld [vmem:[#allocation8 + $0x14] sm:$0xf]
        %v512 = vld [vmem:[#allocation8 + $0x18] sm:$0xf]
        %v513 = vld [vmem:[#allocation8 + $0x1c] sm:$0xf]
        %v514 = vld [vmem:[#allocation8 + $0x20] sm:$0xf]
        %v515 = vld [vmem:[#allocation8 + $0x24] sm:$0xf]
        %v516 = vld [vmem:[#allocation8 + $0x28] sm:$0xf]
        %v517 = vld [vmem:[#allocation8 + $0x2c] sm:$0xf]
        %v518 = vld [vmem:[#allocation8 + $0x30] sm:$0xf]
        %v519 = vld [vmem:[#allocation8 + $0x34] sm:$0xf]
        %v520 = vld [vmem:[#allocation8 + $0x38] sm:$0xf]
        %v521 = vld [vmem:[#allocation8 + $0x3c] sm:$0xf]
        %v522 = vld [vmem:[#allocation8 + $0x40] sm:$0xf]
        %v523 = vld [vmem:[#allocation8 + $0x44] sm:$0xf]
        %v524 = vld [vmem:[#allocation8 + $0x48] sm:$0xf]
        %v525 = vld [vmem:[#allocation8 + $0x4c] sm:$0xf]
        %v526 = vld [vmem:[#allocation8 + $0x50] sm:$0xf]
        %v527 = vld [vmem:[#allocation8 + $0x54] sm:$0xf]
        %v528 = vld [vmem:[#allocation8 + $0x58] sm:$0xf]
        %v529 = vld [vmem:[#allocation8 + $0x5c] sm:$0xf]
        %v530 = vld [vmem:[#allocation8 + $0x60] sm:$0xf]
        %v531 = vld [vmem:[#allocation8 + $0x64] sm:$0xf]
        %v532 = vld [vmem:[#allocation8 + $0x68] sm:$0xf]
        %v533 = vld [vmem:[#allocation8 + $0x6c] sm:$0xf]
        %v534 = vld [vmem:[#allocation8 + $0x70] sm:$0xf]
        %v535 = vld [vmem:[#allocation8 + $0x74] sm:$0xf]
        %v536 = vld [vmem:[#allocation8 + $0x78] sm:$0xf]
        %v537 = vld [vmem:[#allocation8 + $0x7c] sm:$0xf]
        %v570 = vunpack.c.l.b16 %v506
        %v571 = vunpack.c.l.b16 %v507
        %v572 = vunpack.c.l.b16 %v508
        %v573 = vunpack.c.l.b16 %v509
        %v574 = vunpack.c.l.b16 %v510
        %v575 = vunpack.c.l.b16 %v511
        %v576 = vunpack.c.l.b16 %v512
        %v577 = vunpack.c.l.b16 %v513
        %v578 = vunpack.c.l.b16 %v514
        %v579 = vunpack.c.l.b16 %v515
        %v580 = vunpack.c.l.b16 %v516
        %v581 = vunpack.c.l.b16 %v517
        %v582 = vunpack.c.l.b16 %v518
        %v583 = vunpack.c.l.b16 %v519
        %v584 = vunpack.c.l.b16 %v520
        %v585 = vunpack.c.l.b16 %v521
        %v586 = vunpack.c.l.b16 %v522
        %v587 = vunpack.c.l.b16 %v523
        %v588 = vunpack.c.l.b16 %v524
        %v589 = vunpack.c.l.b16 %v525
        %v590 = vunpack.c.l.b16 %v526
        %v591 = vunpack.c.l.b16 %v527
        %v592 = vunpack.c.l.b16 %v528
        %v593 = vunpack.c.l.b16 %v529
        %v594 = vunpack.c.l.b16 %v530
        %v595 = vunpack.c.l.b16 %v531
        %v596 = vunpack.c.l.b16 %v532
        %v597 = vunpack.c.l.b16 %v533
        %v598 = vunpack.c.l.b16 %v534
        %v599 = vunpack.c.l.b16 %v535
        %v600 = vunpack.c.l.b16 %v536
        %v601 = vunpack.c.l.b16 %v537
        %v602 = vpack.c.b16 %v571, %v570
        %v603 = vpack.c.b16 %v573, %v572
        %v604 = vpack.c.b16 %v575, %v574
        %v605 = vpack.c.b16 %v577, %v576
        %v606 = vpack.c.b16 %v579, %v578
        %v607 = vpack.c.b16 %v581, %v580
        %v608 = vpack.c.b16 %v583, %v582
        %v609 = vpack.c.b16 %v585, %v584
        %v610 = vpack.c.b16 %v587, %v586
        %v611 = vpack.c.b16 %v589, %v588
        %v612 = vpack.c.b16 %v591, %v590
        %v613 = vpack.c.b16 %v593, %v592
        %v614 = vpack.c.b16 %v595, %v594
        %v615 = vpack.c.b16 %v597, %v596
        %v616 = vpack.c.b16 %v599, %v598
        %v617 = vpack.c.b16 %v601, %v600
        %634 = vmatprep.subr.bf16.mxu0 0
        %635 = vmatpush1.bf16.msra.mxu0 %v602
        %636 = vmatprep.subr.bf16.mxu0 0
        %637 = vmatpush1.bf16.msra.mxu0 %v603
        %638 = vmatprep.subr.bf16.mxu0 0
        %639 = vmatpush1.bf16.msra.mxu0 %v604
        %640 = vmatprep.subr.bf16.mxu0 0
        %641 = vmatpush1.bf16.msra.mxu0 %v605
        %642 = vmatprep.subr.bf16.mxu0 0
        %643 = vmatpush1.bf16.msra.mxu0 %v606
        %644 = vmatprep.subr.bf16.mxu0 0
        %645 = vmatpush1.bf16.msra.mxu0 %v607
        %646 = vmatprep.subr.bf16.mxu0 0
        %647 = vmatpush1.bf16.msra.mxu0 %v608
        %648 = vmatprep.subr.bf16.mxu0 0
        %649 = vmatpush1.bf16.msra.mxu0 %v609
        %650 = vmatprep.subr.bf16.mxu0 0
        %651 = vmatpush1.bf16.msra.mxu0 %v610
        %652 = vmatprep.subr.bf16.mxu0 0
        %653 = vmatpush1.bf16.msra.mxu0 %v611
        %654 = vmatprep.subr.bf16.mxu0 0
        %655 = vmatpush1.bf16.msra.mxu0 %v612
        %656 = vmatprep.subr.bf16.mxu0 0
        %657 = vmatpush1.bf16.msra.mxu0 %v613
        %658 = vmatprep.subr.bf16.mxu0 0
        %659 = vmatpush1.bf16.msra.mxu0 %v614
        %660 = vmatprep.subr.bf16.mxu0 0
        %661 = vmatpush1.bf16.msra.mxu0 %v615
        %662 = vmatprep.subr.bf16.mxu0 0
        %663 = vmatpush1.bf16.msra.mxu0 %v616
        %664 = vmatprep.subr.bf16.mxu0 0
        %665 = vmatpush1.bf16.msra.mxu0 %v617
        %666 = vmatprep.mubr.bf16.mxu0 %v505
        %667 = vmatmul.mubr.bf16.gmra.mrb[0].mxu0 %v504
        %v668 = vpop.f32.mrb[0].mxu0
        %v669 = vadd.f32 0.0, %v668
        %v670 = vpop.f32.mrb[0].mxu0
        %v671 = vpop.f32.mrb[0].mxu0
        %v672 = vpop.f32.mrb[0].mxu0
        %673 = vdwg.mxu0
        %v674 = vadd.f32 %v503, %v669
        %675 = vst [vmem:[%s310] sm:$0xff] %v674
        %s676 = sand.u32 %s168, 1
        %s677 = scalar_lea.sflag [#allocation5], %s676
        %s678 = sand.u32 %s168, 1
        %s679 = smul.addr %s678, 8
        %s680 = scalar_lea.vmem [#allocation9], %s679
        // Predicated region
        $region57: #{tpu_custom_call.1} parent=39 // pred_check
          %p681 = pneg %p178
        $region58: #{tpu_custom_call.1} parent=39 // pred_check_branch
          %683 = sbr.rel (%p681) target = $region60
        $region59: #{tpu_custom_call.1} parent=39 // pred_region
          %s685 = ssub.s32 128, 128
          %686 = vsyncadd %s677, %s685
          %s687 = smul.addr %s27, 128
          %s688 = scalar_lea.hbm %s5, %s687
          %s690 = sshll.u32 %s680, 4
          %s691 = int_to_ptr.vmem [resolvable:$true] %s690
          %693 = dma.vmem_to_hbm [thread:$0]  %s691, 128, %s688, %s677
        $region60: #{tpu_custom_call.1} parent=39 // pred_fallthru
          _
      $region40: #{tpu_custom_call.1} parent=5 // pred_fallthru
        _
      %p694 = scmp.le.s32.totalorder 2, %s18
      // Predicated region
      $region61: #{tpu_custom_call.1} parent=5 // pred_check
        %p695 = pneg %p694
      $region62: #{tpu_custom_call.1} parent=5 // pred_check_branch
        %697 = sbr.rel (%p695) target = $region64
      $region63: #{tpu_custom_call.1} parent=5 // pred_region
        %s698 = ssub.s32 %s18, 2
        // Predicated region
        $region65: #{tpu_custom_call.1} parent=63 // pred_check
          %p699 = pneg %p184
        $region66: #{tpu_custom_call.1} parent=63 // pred_check_branch
          %701 = sbr.rel (%p699) target = $region68
        $region67: #{tpu_custom_call.1} parent=63 // pred_region
          %s702 = sand.u32 %s169, 1
          %s703 = scalar_lea.sflag [#allocation5], %s702
          %s704 = sand.u32 %s169, 1
          %s705 = smul.addr %s704, 8
          %s706 = scalar_lea.vmem [#allocation9], %s705
          %707 = dma.done %s703, 128
        $region68: #{tpu_custom_call.1} parent=63 // pred_fallthru
          _
      $region64: #{tpu_custom_call.1} parent=5 // pred_fallthru
        _
    $region6: #{tpu_custom_call.1} parent=1 // loop_footer
      %s22 = sadd.s32 1, %s18
    $region7: #{tpu_custom_call.1} parent=1 // loop_footer_branch
      %17 = sbr.rel target = $region3
    $region8: #{tpu_custom_call.1} parent=1 // loop_exit
      _
    %708 = vsyncpa [#allocation4], 1
    %s709 = scalar_lea.sflag [#allocation4], 1
    %710 = vsyncpa %s709, 1
    %711 = vsyncpa [#allocation7], 1
    %712 = vsyncpa [#allocation5], 1
    %s713 = scalar_lea.sflag [#allocation5], 1
    %714 = vsyncpa %s713, 1

</llo_original>
